<compile_context>
chip_gen: v5e
topology: v5e:2x2
jax: 0.10.0
libtpu: 0.0.40
codegen_flags: <defaults>
</compile_context>

<pallas_src>
import functools

import jax
import jax.numpy as jnp
from jax.experimental import pallas as pl
from jax.experimental.pallas import tpu as pltpu


def _ce_stable_kernel(logits_ref, labels_ref, loss_ref, acc_ref, *,
                      eps, n_total, mean):
    i = pl.program_id(0)
    tile_n = logits_ref.shape[0]

    # Zero the persistent per-row accumulator on the first grid step.
    @pl.when(i == 0)
    def _():
        acc_ref[...] = jnp.zeros_like(acc_ref)

    x = logits_ref[...].astype(jnp.float32)                  # (tile_n, C)

    # Mask rows past the end of the batch (possible partial last tile).
    row = jax.lax.broadcasted_iota(jnp.int32, (tile_n, 1), 0)
    valid = row < (n_total - i * tile_n)                     # (tile_n, 1)
    x = jnp.where(valid, x, 0.0)

    # Row-wise numerically-stable softmax statistics (exp over the whole tile
    # is needed for the denominator; log is per-row only).
    m = jnp.max(x, axis=-1, keepdims=True)                   # (tile_n, 1)
    e = jnp.exp(x - m)                                       # (tile_n, C)
    s = jnp.sum(e, axis=-1, keepdims=True)                   # (tile_n, 1)

    # Gather exp(x[label] - m) via one-hot select from the resident labels.
    start = i * tile_n
    if tile_n % 8 == 0:
        start = pl.multiple_of(start, 8)
    labels = labels_ref[pl.ds(start, tile_n), :]             # (tile_n, 1) int32
    col = jax.lax.broadcasted_iota(jnp.int32, e.shape, 1)
    e_lab = jnp.sum(jnp.where(col == labels, e, 0.0), axis=-1, keepdims=True)

    # -log(softmax(x)[label] + eps) == log(s) - log(e_lab + eps*s)
    loss_row = jnp.log(s) - jnp.log(e_lab + jnp.float32(eps) * s)
    acc_ref[...] += jnp.where(valid, loss_row, 0.0)

    # Finalize: single cross-sublane reduction (+ mean divide) on the last step.
    @pl.when(i == pl.num_programs(0) - 1)
    def _():
        total = jnp.sum(acc_ref[...], axis=0, keepdims=True)  # (1, 1)
        if mean:
            total = total * jnp.float32(1.0 / n_total)
        loss_ref[...] = total


def _round_up(x, m):
    return ((x + m - 1) // m) * m


def cross_entropy_loss_stable(outputs, labels, *, eps=1e-5, reduction="mean",
                              tile_n=256):
    """Pallas TPU implementation of CrossEntropyLossStable.forward."""
    assert reduction in ("mean", "sum")
    n, c = outputs.shape
    itemsize = jnp.dtype(outputs.dtype).itemsize
    # Rows per sublane pack: 8 for 32-bit inputs, 16 for 16-bit (bf16) inputs.
    row_align = 16 if itemsize == 2 else 8

    # Row tile: as large as requested, but aligned, no larger than the batch
    # allows, and with the double-buffered logits tile inside a conservative
    # scoped-VMEM budget valid on v5e (16 MiB default) .. v7x (64 MiB physical).
    vmem_budget = 20 << 20
    cap_rows = max(row_align,
                   (vmem_budget // (2 * c * itemsize)) // row_align * row_align)
    if n < row_align:
        tile = n                                   # single (partial) block
    else:
        tile = min(_round_up(tile_n, row_align), cap_rows,
                   (n // row_align) * row_align)
    grid = pl.cdiv(n, tile)
    n_pad = grid * tile

    # Labels live in VMEM for the whole kernel (one DMA); pad to n_pad rows
    # with class 0 -- padded rows are masked out inside the kernel.
    # TODO(synk): for very large N, switch labels back to per-tile blocks (or a
    # lane-dense (grid, tile) layout) to avoid the 128-lane padded footprint.
    labels_pad = jnp.pad(labels.astype(jnp.int32), (0, n_pad - n)).reshape(n_pad, 1)

    kernel = functools.partial(_ce_stable_kernel, eps=float(eps), n_total=n,
                               mean=(reduction == "mean"))

    # Explicit scoped-VMEM request with headroom (kept below v7x's 64 MiB).
    needed = (2 * tile * c * itemsize                  # double-buffered logits
              + _round_up(n_pad, 8) * 128 * 4          # resident labels (padded)
              + tile * 4 + (64 << 10))                 # scratch / output / slack
    vmem_limit = int(min(max(needed + (2 << 20), 8 << 20), 48 << 20))

    loss = pl.pallas_call(
        kernel,
        out_shape=jax.ShapeDtypeStruct((1, 1), jnp.float32),
        grid_spec=pltpu.PrefetchScalarGridSpec(
            num_scalar_prefetch=0,
            grid=(grid,),
            in_specs=[
                pl.BlockSpec((tile, c), lambda i: (i, 0)),     # logits tile
                pl.BlockSpec((n_pad, 1), lambda i: (0, 0)),    # labels, resident
            ],
            out_specs=pl.BlockSpec((1, 1), lambda i: (0, 0)),  # scalar result
            scratch_shapes=[pltpu.VMEM((tile, 1), jnp.float32)],
        ),
        compiler_params=pltpu.CompilerParams(
            dimension_semantics=("arbitrary",),                # reduction axis
            vmem_limit_bytes=vmem_limit),
    )(outputs, labels_pad)
    # TODO(synk): optional v7x megacore split (leading size-2 "parallel" axis
    # with per-core partial sums combined in the wrapper).
    return loss[0, 0]


def _reference(outputs, labels, eps=1e-5, reduction="mean"):
    p = jax.nn.softmax(outputs.astype(jnp.float32), axis=-1)
    logp = jnp.log(p + eps)
    picked = jnp.take_along_axis(logp, labels[:, None].astype(jnp.int32), axis=1)[:, 0]
    return -jnp.mean(picked) if reduction == "mean" else -jnp.sum(picked)


if __name__ == "__main__":
    key = jax.random.PRNGKey(0)

    cases = [
        (16, 32, "mean"),   # divisible batch
        (19, 40, "mean"),   # non-divisible batch -> partial last tile + masking
        (16, 32, "sum"),    # sum-reduction path
    ]
    for idx, (N, C, red) in enumerate(cases):
        k1, k2 = jax.random.split(jax.random.fold_in(key, idx))
        outputs = jax.random.normal(k1, (N, C), dtype=jnp.float32)
        labels = jax.random.randint(k2, (N,), 0, C, dtype=jnp.int32)

        loss = cross_entropy_loss_stable(outputs, labels, eps=1e-5, reduction=red)
        loss = jax.block_until_ready(loss)
        ref = _reference(outputs, labels, eps=1e-5, reduction=red)
        assert jnp.allclose(loss, ref, rtol=1e-4, atol=1e-4), (red, loss, ref)

    print("KERNEL_OK")
</pallas_src>

<mosaic_0001>
module attributes {stable_mosaic.version = 11 : i64} {
  func.func @_ce_stable_kernel(%arg0: i32, %arg1: memref<16x32xf32, #tpu.memory_space<vmem>>, %arg2: memref<16x1xi32, #tpu.memory_space<vmem>>, %arg3: memref<1x1xf32, #tpu.memory_space<vmem>>, %arg4: memref<16x1xf32, #tpu.memory_space<vmem>>) attributes {dimension_semantics = [#tpu.dimension_semantics<arbitrary>], iteration_bounds = array<i64: 1>, scalar_prefetch = 0 : i64, scratch_operands = 1 : i64, tpu.core_type = #tpu.core_type<tc>, window_params = [{transform_indices = @transform_0, window_bounds = array<i64: 16, 32>}, {pipeline_mode = #tpu.pipeline_mode<synchronous>, transform_indices = @transform_1, window_bounds = array<i64: 16, 1>}, {pipeline_mode = #tpu.pipeline_mode<synchronous>, transform_indices = @transform_2, window_bounds = array<i64: 1, 1>}]} {
    %c0_i32 = arith.constant 0 : i32
    %0 = arith.cmpi eq, %arg0, %c0_i32 : i32
    %1 = arith.extui %0 : i1 to i32
    %c0_i32_0 = arith.constant 0 : i32
    %2 = arith.cmpi ne, %1, %c0_i32_0 : i32
    scf.if %2 {
      %cst_17 = arith.constant 0.000000e+00 : f32
      %45 = vector.broadcast %cst_17 : f32 to vector<16x1xf32>
      %c0_18 = arith.constant 0 : index
      %c0_19 = arith.constant 0 : index
      %46 = vector.load %arg4[%c0_18, %c0_19] : memref<16x1xf32, #tpu.memory_space<vmem>>, vector<16x1xf32>
      tpu.vector_store %arg4[%c0_18, %c0_19], %45 {strides = array<i32>} : memref<16x1xf32, #tpu.memory_space<vmem>>, vector<16x1xf32>,
    } else {
    }
    %c0 = arith.constant 0 : index
    %c0_1 = arith.constant 0 : index
    %3 = vector.load %arg1[%c0, %c0_1] : memref<16x32xf32, #tpu.memory_space<vmem>>, vector<16x32xf32>
    %4 = tpu.iota {dimensions = array<i32: 0>} : vector<16x1xi32>
    %c16_i32 = arith.constant 16 : i32
    %5 = arith.muli %arg0, %c16_i32 : i32
    %c16_i32_2 = arith.constant 16 : i32
    %6 = arith.subi %c16_i32_2, %5 : i32
    %7 = vector.broadcast %6 : i32 to vector<16x1xi32>
    %8 = arith.cmpi slt, %4, %7 : vector<16x1xi32>
    %cst = arith.constant 0.000000e+00 : f32
    %9 = vector.shape_cast %8 : vector<16x1xi1> to vector<16x1xi1>
    %10 = vector.broadcast %9 : vector<16x1xi1> to vector<16x32xi1>
    %11 = vector.broadcast %cst : f32 to vector<16x32xf32>
    %12 = arith.select %10, %3, %11 : vector<16x32xi1>, vector<16x32xf32>
    %cst_3 = arith.constant dense<0xFF800000> : vector<16xf32>
    %13 = vector.multi_reduction <maximumf>, %12, %cst_3 [1] : vector<16x32xf32> to vector<16xf32>
    %14 = vector.shape_cast %13 : vector<16xf32> to vector<16x1xf32>
    %15 = vector.broadcast %14 : vector<16x1xf32> to vector<16x32xf32>
    %16 = arith.subf %12, %15 : vector<16x32xf32>
    %17 = math.exp %16 : vector<16x32xf32>
    %cst_4 = arith.constant dense<0.000000e+00> : vector<16xf32>
    %18 = vector.multi_reduction <add>, %17, %cst_4 [1] : vector<16x32xf32> to vector<16xf32>
    %19 = vector.shape_cast %18 : vector<16xf32> to vector<16x1xf32>
    %c16_i32_5 = arith.constant 16 : i32
    %20 = arith.muli %arg0, %c16_i32_5 : i32
    %21 = tpu.assume_multiple %20, 8 : i32
    %22 = arith.index_cast %21 : i32 to index
    %c0_6 = arith.constant 0 : index
    %23 = vector.load %arg2[%22, %c0_6] : memref<16x1xi32, #tpu.memory_space<vmem>>, vector<16x1xi32>
    %24 = tpu.iota {dimensions = array<i32: 1>} : vector<16x32xi32>
    %25 = vector.broadcast %23 : vector<16x1xi32> to vector<16x32xi32>
    %26 = arith.cmpi eq, %24, %25 : vector<16x32xi32>
    %cst_7 = arith.constant 0.000000e+00 : f32
    %27 = vector.broadcast %cst_7 : f32 to vector<16x32xf32>
    %28 = arith.select %26, %17, %27 : vector<16x32xi1>, vector<16x32xf32>
    %cst_8 = arith.constant dense<0.000000e+00> : vector<16xf32>
    %29 = vector.multi_reduction <add>, %28, %cst_8 [1] : vector<16x32xf32> to vector<16xf32>
    %30 = vector.shape_cast %29 : vector<16xf32> to vector<16x1xf32>
    %31 = math.log %19 : vector<16x1xf32>
    %cst_9 = arith.constant 9.99999974E-6 : f32
    %32 = vector.broadcast %cst_9 : f32 to vector<16x1xf32>
    %33 = arith.mulf %32, %19 : vector<16x1xf32>
    %34 = arith.addf %30, %33 : vector<16x1xf32>
    %35 = math.log %34 : vector<16x1xf32>
    %36 = arith.subf %31, %35 : vector<16x1xf32>
    %c0_10 = arith.constant 0 : index
    %c0_11 = arith.constant 0 : index
    %37 = vector.load %arg4[%c0_10, %c0_11] : memref<16x1xf32, #tpu.memory_space<vmem>>, vector<16x1xf32>
    %cst_12 = arith.constant 0.000000e+00 : f32
    %38 = vector.broadcast %cst_12 : f32 to vector<16x1xf32>
    %39 = arith.select %8, %36, %38 : vector<16x1xi1>, vector<16x1xf32>
    %40 = arith.addf %37, %39 : vector<16x1xf32>
    %c0_13 = arith.constant 0 : index
    %c0_14 = arith.constant 0 : index
    %41 = vector.load %arg4[%c0_13, %c0_14] : memref<16x1xf32, #tpu.memory_space<vmem>>, vector<16x1xf32>
    tpu.vector_store %arg4[%c0_13, %c0_14], %40 {strides = array<i32>} : memref<16x1xf32, #tpu.memory_space<vmem>>, vector<16x1xf32>,
    %c0_i32_15 = arith.constant 0 : i32
    %42 = arith.cmpi eq, %arg0, %c0_i32_15 : i32
    %43 = arith.extui %42 : i1 to i32
    %c0_i32_16 = arith.constant 0 : i32
    %44 = arith.cmpi ne, %43, %c0_i32_16 : i32
    scf.if %44 {
      %c0_17 = arith.constant 0 : index
      %c0_18 = arith.constant 0 : index
      %45 = vector.load %arg4[%c0_17, %c0_18] : memref<16x1xf32, #tpu.memory_space<vmem>>, vector<16x1xf32>
      %cst_19 = arith.constant dense<0.000000e+00> : vector<1xf32>
      %46 = vector.multi_reduction <add>, %45, %cst_19 [0] : vector<16x1xf32> to vector<1xf32>
      %47 = vector.shape_cast %46 : vector<1xf32> to vector<1x1xf32>
      %cst_20 = arith.constant 6.250000e-02 : f32
      %48 = vector.broadcast %cst_20 : f32 to vector<1x1xf32>
      %49 = arith.mulf %47, %48 : vector<1x1xf32>
      %c0_21 = arith.constant 0 : index
      %c0_22 = arith.constant 0 : index
      %50 = vector.load %arg3[%c0_21, %c0_22] : memref<1x1xf32, #tpu.memory_space<vmem>>, vector<1x1xf32>
      tpu.vector_store %arg3[%c0_21, %c0_22], %49 {strides = array<i32>} : memref<1x1xf32, #tpu.memory_space<vmem>>, vector<1x1xf32>,
    } else {
    }
    return
  }
  func.func @transform_0(%arg0: i32) -> (i32, i32) {
    %c0_i32 = arith.constant 0 : i32
    %c0_i32_0 = arith.constant 0 : i32
    return %arg0, %c0_i32 : i32, i32
  }
  func.func @transform_1(%arg0: i32) -> (i32, i32) {
    %c0_i32 = arith.constant 0 : i32
    %c0_i32_0 = arith.constant 0 : i32
    %c0_i32_1 = arith.constant 0 : i32
    return %c0_i32, %c0_i32_0 : i32, i32
  }
  func.func @transform_2(%arg0: i32) -> (i32, i32) {
    %c0_i32 = arith.constant 0 : i32
    %c0_i32_0 = arith.constant 0 : i32
    %c0_i32_1 = arith.constant 0 : i32
    return %c0_i32, %c0_i32_0 : i32, i32
  }
}

</mosaic_0001>

<llo_original>
// kernel: tpu_custom_call.1
$region0: #{tpu_custom_call.1}
  #allocation0 [shape = 'u32[]', space=smem, size = 0x4, offset = 0x4, fixed_abs, tag = 'smem constant byte address 0x4 - core index']
  #allocation1 [shape = 'u32[72,128]{1,0:T(1,128)}', space=vmem, size = 0x9000, scoped, tag = 'internal scratch']
  #allocation2 [shape = 'f32[16,1]{1,0:T(8,128)}', space=vmem, size = 0x2000, scoped, tag = 'scratch operand']
  %s0 = inlined_call_operand.vmem [shape: f32[16,32], index: 0, kind: input, shape index: {}]
  %s1 = inlined_call_operand.vmem [shape: s32[16,1], index: 1, kind: input, shape index: {}]
  %s2 = inlined_call_operand.hbm [shape: f32[1,1], index: 2, kind: output, shape index: {}]
  %s3 = sld [smem:[#allocation0]]
  $region26: #{tpu_custom_call.1} parent=0
    _
  %s5 = ssub.s32 1, %s3
  %s6 = scalar_select 0, %s5, %s3
  $region1: #{tpu_custom_call.1} parent=0
    #allocation3 [shape = 'u8[512]{0}', space=vmem, size = 0x400, scoped, tag = 'output window, operand 0, single buffered']
    #allocation4 [shape = 's32[1]{0}', space=sflag, size = 0x4, scoped, tag = 'scoped memory for tpu_custom_call.1']
    %7 = vsyncpa [#allocation4], 0
    // Predicated region
    $region2: #{tpu_custom_call.1} parent=1 // pred_check
      _
    $region3: #{tpu_custom_call.1} parent=1 // pred_check_branch
      %9 = sbr.rel (0) target = $region5
    $region4: #{tpu_custom_call.1} parent=1 // pred_region
      _
    $region5: #{tpu_custom_call.1} parent=1 // pred_fallthru
      _
    // Predicated region
    $region6: #{tpu_custom_call.1} parent=1 // pred_check
      _
    $region7: #{tpu_custom_call.1} parent=1 // pred_check_branch
      %11 = sbr.rel (0) target = $region9
    $region8: #{tpu_custom_call.1} parent=1 // pred_region
      _
    $region9: #{tpu_custom_call.1} parent=1 // pred_fallthru
      _
    %p12 = scmp.eq.s32.totalorder 0, 0
    // Predicated region
    $region10: #{tpu_custom_call.1} parent=1 // pred_check
      %p13 = pneg %p12
    $region11: #{tpu_custom_call.1} parent=1 // pred_check_branch
      %15 = sbr.rel (%p13) target = $region13
    $region12: #{tpu_custom_call.1} parent=1 // pred_region
      %vm16 = vcmask 7168
      %17 = vst.msk [vmem:[#allocation2] sm:$0xff] %vm16, 0.0
      %18 = vst.msk [vmem:[#allocation2 + $0x8] sm:$0xff] %vm16, 0.0
    $region13: #{tpu_custom_call.1} parent=1 // pred_fallthru
      _
    %v19 = vld [vmem:[%s0] sm:$0xff]
    %v20 = vld [vmem:[%s0 + $0x8] sm:$0xff]
    %v21 = vlaneseq
    %v22 = vshrl.u32 %v21, 7
    %v23 = vadd.s32 %v22, 8
    %s24 = smul.u32 0, 16
    %s25 = ssub.s32 16, %s24
    %v26 = vstv %s25
    %vm27 = vcmp.lt.s32.totalorder %v22, %v26
    %vm28 = vcmp.lt.s32.totalorder %v23, %v26
    %v29 = vsel %vm27, 1, 0
    %v30 = vsel %vm28, 1, 0
    %vm31 = vcmp.eq.s32.totalorder %v29, 1
    %vm32 = vcmp.eq.s32.totalorder %v30, 1
    %v33 = vsel %vm31, %v19, 0.0
    %v34 = vsel %vm32, %v20, 0.0
    %vm35 = vcmask 261120
    %v36 = vsel %vm35, %v33, -inf
    %37 = vmax.xlane.f32.xlu0 %v36
    %v38 = vpop.xlane.xlu0 %37
    %v39 = vsel %vm35, %v34, -inf
    %40 = vmax.xlane.f32.xlu0 %v39
    %v41 = vpop.xlane.xlu0 %40
    %v42 = vsub.f32 %v33, %v38
    %v43 = vsub.f32 %v34, %v41
    %v44 = vmul.f32 %v42, 1.442695
    %v45 = vpow.pop %v44
    %v46 = vmul.f32 %v43, 1.442695
    %v47 = vpow.pop %v46
    %v48 = vsel %vm35, %v45, 0.0
    %49 = vadd.xlane.f32.xlu0 %v48
    %v50 = vpop.xlane.xlu0 %49
    %v51 = vsel %vm35, %v47, 0.0
    %52 = vadd.xlane.f32.xlu0 %v51
    %v53 = vpop.xlane.xlu0 %52
    %s54 = scalar_lea.vmem %s1, %s24
    %v55 = vld [vmem:[%s54] sm:$0xff]
    %v56 = vld [vmem:[%s54 + $0x8] sm:$0xff]
    %v57 = vlaneseq
    %v58 = vand.u32 %v57, 127
    %59 = vset.pattern.permute.xlu0 0
    %60 = vperm.xlu0 %59, %v55
    %v61 = vpop.permute.xlu0 %60
    %62 = vset.pattern.permute.xlu0 0
    %63 = vperm.xlu0 %62, %v56
    %v64 = vpop.permute.xlu0 %63
    %vm65 = vcmp.eq.s32.totalorder %v58, %v61
    %vm66 = vcmp.eq.s32.totalorder %v58, %v64
    %v67 = vsel %vm65, %v45, 0.0
    %v68 = vsel %vm66, %v47, 0.0
    %v69 = vsel %vm35, %v67, 0.0
    %70 = vadd.xlane.f32.xlu0 %v69
    %v71 = vpop.xlane.xlu0 %70
    %v72 = vsel %vm35, %v68, 0.0
    %73 = vadd.xlane.f32.xlu0 %v72
    %v74 = vpop.xlane.xlu0 %73
    %v75 = vlog2.pop %v50
    %v76 = vmul.f32 %v75, 0.6931472
    %v77 = vlog2.pop %v53
    %v78 = vmul.f32 %v77, 0.6931472
    %v79 = vmul.f32 %v50, 1e-05
    %v80 = vmul.f32 %v53, 1e-05
    %v81 = vadd.f32 %v71, %v79
    %v82 = vadd.f32 %v74, %v80
    %v83 = vlog2.pop %v81
    %v84 = vmul.f32 %v83, 0.6931472
    %v85 = vlog2.pop %v82
    %v86 = vmul.f32 %v85, 0.6931472
    %v87 = vsub.f32 %v76, %v84
    %v88 = vsub.f32 %v78, %v86
    %v89 = vld [vmem:[#allocation2] sm:$0xff]
    %v90 = vld [vmem:[#allocation2 + $0x8] sm:$0xff]
    %v91 = vsel %vm27, %v87, 0.0
    %v92 = vsel %vm28, %v88, 0.0
    %v93 = vadd.f32 %v89, %v91
    %v94 = vadd.f32 %v90, %v92
    %vm95 = vcmask 7168
    %96 = vst.msk [vmem:[#allocation2] sm:$0xff] %vm95, %v93
    %97 = vst.msk [vmem:[#allocation2 + $0x8] sm:$0xff] %vm95, %v94
    // Predicated region
    $region14: #{tpu_custom_call.1} parent=1 // pred_check
      %p98 = pneg %p12
    $region15: #{tpu_custom_call.1} parent=1 // pred_check_branch
      %100 = sbr.rel (%p98) target = $region17
    $region16: #{tpu_custom_call.1} parent=1 // pred_region
      %v101 = vld [vmem:[#allocation2] sm:$0xff]
      %v102 = vld [vmem:[#allocation2 + $0x8] sm:$0xff]
      %v103 = vsel %vm95, %v101, 0.0
      %v104 = vsel %vm95, %v102, 0.0
      %v105 = vadd.f32 %v103, %v104
      %v106 = vrot.slane %v105, 4
      %v107 = vadd.f32 %v105, %v106
      %v108 = vrot.slane %v107, 2
      %v109 = vadd.f32 %v107, %v108
      %v110 = vrot.slane %v109, 1
      %v111 = vadd.f32 %v109, %v110
      %v112 = vmul.f32 %v111, 0.0625
      %vm113 = vcmask 0
      %114 = vst.msk [vmem:[#allocation3] sm:$0x1] %vm113, %v112
    $region17: #{tpu_custom_call.1} parent=1 // pred_fallthru
      _
    // Predicated region
    $region18: #{tpu_custom_call.1} parent=1 // pred_check
      _
    $region19: #{tpu_custom_call.1} parent=1 // pred_check_branch
      %116 = sbr.rel (0) target = $region21
    $region20: #{tpu_custom_call.1} parent=1 // pred_region
      %118 = vsyncadd [#allocation4], 0
      %s120 = sshll.u32 [#allocation3], 4
      %s121 = int_to_ptr.vmem [resolvable:$true] %s120
      %s122 = sshll.u32 %s2, 4
      %s123 = int_to_ptr.hbm [resolvable:$true] %s122
      %125 = dma.vmem_to_hbm [thread:$0]  %s121, 16, %s123, [#allocation4]
    $region21: #{tpu_custom_call.1} parent=1 // pred_fallthru
      _
    // Predicated region
    $region22: #{tpu_custom_call.1} parent=1 // pred_check
      _
    $region23: #{tpu_custom_call.1} parent=1 // pred_check_branch
      %127 = sbr.rel (0) target = $region25
    $region24: #{tpu_custom_call.1} parent=1 // pred_region
      %129 = dma.done [#allocation4], 16
    $region25: #{tpu_custom_call.1} parent=1 // pred_fallthru
      _
    %130 = vsyncpa [#allocation4], 1

</llo_original>
